<compile_context>
chip_gen: v6e
topology: v6e:2x2x1
jax: 0.10.0
libtpu: 0.0.40
codegen_flags: <defaults>
</compile_context>

<pallas_src>
import jax
import jax.numpy as jnp
from jax.experimental import pallas as pl
from jax.experimental.pallas import tpu as pltpu

EPS = 1e-9
_LANES = 128
_ROW_ALIGN = 32          # multiple of 8 (f32 sublanes) and 16 (bf16 packing)


def _cdiv(a, b):
    return (a + b - 1) // b


def _vmem_capacity_bytes():
    try:
        cap = int(getattr(pltpu.get_tpu_info(), "vmem_capacity_bytes", 0))
        if cap > 0:
            return cap
    except Exception:
        pass
    return 64 * 1024 * 1024          # conservative fallback (v7x per-core VMEM)


def _default_num_partials():
    # >= 2 partials let the leading "parallel" grid axis shard across
    # TensorCores (v7x has 2 per chip); single-TC chips use 1 partial.
    try:
        info = pltpu.get_tpu_info()
        for attr in ("num_tensorcores", "tensorcore_count", "num_cores", "core_count"):
            v = getattr(info, attr, None)
            if isinstance(v, int) and v > 0:
                return min(8, 2 * v) if v >= 2 else 1
    except Exception:
        pass
    return 2                         # safe default on every generation


def _make_kernel(rows, block_rows, blocks_per_partial, full_blocks, grid_blocks):
    """Per-tile partial-sum kernel; all sizes are static Python ints."""

    def kernel(pred_ref, true_ref, out_ref):
        # pred_ref / true_ref: (block_rows, 128) VMEM tiles (any float dtype).
        # out_ref: (1, 8, 128) f32 accumulator block; its block index depends
        # only on the outer ("parallel") grid axis, so it stays resident in
        # VMEM across the inner ("arbitrary") reduction axis.
        i_idx = pl.program_id(1)

        @pl.when(i_idx == 0)
        def _init():
            out_ref[...] = jnp.zeros_like(out_ref)

        p = pred_ref[...].astype(jnp.float32)
        t = true_ref[...].astype(jnp.float32)
        d = p - t
        val = jnp.sqrt(d * d + jnp.float32(EPS))          # sqrt -> EUP slot

        def accum(v):
            # Pure-VPU vadd tree: fold block_rows//8 vregs into the (8,128)
            # accumulator; no cross-lane (XLU) work in the steady state.
            out_ref[...] += jnp.sum(
                v.reshape(block_rows // 8, 8, _LANES), axis=0
            )[None]

        if full_blocks == grid_blocks:
            # Every grid step maps to a fully in-bounds tile: no masking.
            accum(val)
        else:
            g = pl.program_id(0) * blocks_per_partial + i_idx

            def _masked():
                # Partial last tile (and clamped "overhang" steps): rows at or
                # beyond `rows` were never DMA'd and contain garbage -> mask.
                valid = rows - g * block_rows
                row_id = jax.lax.broadcasted_iota(jnp.int32, (block_rows, _LANES), 0)
                accum(jnp.where(row_id < valid, val, jnp.float32(0.0)))

            if full_blocks == 0:
                _masked()
            else:
                pl.when(g < full_blocks)(lambda: accum(val))
                pl.when(g >= full_blocks)(_masked)

    return kernel


def mcrmse_loss(y_pred, y_true, *, max_block_rows=8192, num_partials=None):
    """MCRMSELoss forward, reduction='mean'.  Returns a float32 scalar."""
    assert y_pred.shape == y_true.shape
    assert y_pred.ndim == 2, "expected (batch, num_targets)"
    B, F = y_pred.shape
    N = B * F

    # --- lane-dense view: (B, F) -> (N,) is a free bitcast; no jnp.pad copy. ---
    p_flat = y_pred.reshape(-1)
    t_flat = y_true.reshape(-1)

    rows = N // _LANES
    main = rows * _LANES
    lane_tail = N - main

    # Lane tail (< 128 elements): one-line jnp in the wrapper.
    if lane_tail:
        dt = p_flat[main:].astype(jnp.float32) - t_flat[main:].astype(jnp.float32)
        tail_sum = jnp.sum(jnp.sqrt(dt * dt + jnp.float32(EPS)))
    else:
        tail_sum = jnp.float32(0.0)

    if rows < _ROW_ALIGN:
        # Not enough data to fill one aligned tile -- plain XLA is already optimal.
        dp = p_flat[:main].astype(jnp.float32) - t_flat[:main].astype(jnp.float32)
        head_sum = jnp.sum(jnp.sqrt(dp * dp + jnp.float32(EPS)))
        return (head_sum + tail_sum) / jnp.float32(N)

    # When N % 128 == 0 these slices are identities (zero extra HBM traffic);
    # otherwise a single prefix copy is unavoidable without padding.
    p_main = p_flat[:main].reshape(rows, _LANES)
    t_main = t_flat[:main].reshape(rows, _LANES)

    # --- hardware-aware tile sizing -------------------------------------------
    itemsize = jnp.dtype(y_pred.dtype).itemsize
    vmem_cap = _vmem_capacity_bytes()
    vmem_budget = (vmem_cap * 7) // 10                 # headroom for out/scratch
    # Double-buffered footprint: 2 inputs x 2 pipeline buffers per tile.
    max_rows_vmem = vmem_budget // (4 * _LANES * itemsize)
    block_rows = min(int(max_block_rows), int(max_rows_vmem))
    block_rows = max(_ROW_ALIGN, (block_rows // _ROW_ALIGN) * _ROW_ALIGN)
    # Never exceed the array itself: every block start stays in bounds; only the
    # last block may partially overrun (masked in-kernel).
    block_rows = min(block_rows, (rows // _ROW_ALIGN) * _ROW_ALIGN)

    total_blocks = _cdiv(rows, block_rows)
    full_blocks = rows // block_rows

    if num_partials is None:
        num_partials = _default_num_partials()
    num_partials = max(1, min(int(num_partials), total_blocks))
    blocks_per_partial = _cdiv(total_blocks, num_partials)
    grid_blocks = num_partials * blocks_per_partial

    def _in_map(p_idx, i_idx):
        g = p_idx * blocks_per_partial + i_idx
        if grid_blocks > total_blocks:
            # Overhang steps re-read the last valid block; the kernel masks
            # their contribution to zero.
            g = jnp.minimum(g, total_blocks - 1)
        return (g, 0)

    footprint = 4 * block_rows * _LANES * itemsize
    vmem_limit = int(min(vmem_cap, max(footprint + (8 << 20), 32 << 20)))

    kernel = _make_kernel(rows, block_rows, blocks_per_partial,
                          full_blocks, grid_blocks)

    partials = pl.pallas_call(
        kernel,
        out_shape=jax.ShapeDtypeStruct((num_partials, 8, _LANES), jnp.float32),
        grid=(num_partials, blocks_per_partial),
        in_specs=[
            pl.BlockSpec((block_rows, _LANES), _in_map),
            pl.BlockSpec((block_rows, _LANES), _in_map),
        ],
        out_specs=pl.BlockSpec((1, 8, _LANES), lambda p_idx, i_idx: (p_idx, 0, 0)),
        compiler_params=pltpu.CompilerParams(
            dimension_semantics=("parallel", "arbitrary"),
            vmem_limit_bytes=vmem_limit,
        ),
    )(p_main, t_main)

    total = jnp.sum(partials, dtype=jnp.float32) + tail_sum
    # mean(dim=0).mean() == global mean because every column has B entries.
    return total / jnp.float32(N)


def mcrmse_loss_ref(y_pred, y_true):
    # Pure-JAX reference mirroring the PyTorch module (reduction='mean').
    d = y_pred.astype(jnp.float32) - y_true.astype(jnp.float32)
    per_elem = jnp.sqrt(d * d + jnp.float32(EPS))
    return per_elem.mean(axis=0).mean()


if __name__ == "__main__":
    key = jax.random.PRNGKey(0)
    ks = jax.random.split(key, 8)

    def check(out, ref, atol=1e-5, rtol=1e-5):
        jax.block_until_ready(out)
        assert jnp.allclose(out, ref, atol=atol, rtol=rtol), (out, ref)

    # Case 1: typical MCRMSE shape (batch, 6 targets); N % 128 == 0 so the
    # reshape is a free bitcast; rows=48 -> one full block + one masked tail.
    yp = jax.random.normal(ks[0], (1024, 6), dtype=jnp.float32)
    yt = jax.random.normal(ks[1], (1024, 6), dtype=jnp.float32)
    check(mcrmse_loss(yp, yt), mcrmse_loss_ref(yp, yt))

    # Case 2: multi-block pipelined path across two partial sums (tiny tiles so
    # the tiled grid runs even at small size); fully divisible -> no masking.
    yp = jax.random.normal(ks[2], (512, 32), dtype=jnp.float32)
    yt = jax.random.normal(ks[3], (512, 32), dtype=jnp.float32)
    check(mcrmse_loss(yp, yt, max_block_rows=32, num_partials=2),
          mcrmse_loss_ref(yp, yt))

    # Case 3: row tail + grid overhang (3 blocks over 2 partials) -> exercises
    # the clamped index_map and the in-kernel iota mask together.
    yp = jax.random.normal(ks[4], (70, 128), dtype=jnp.float32)
    yt = jax.random.normal(ks[5], (70, 128), dtype=jnp.float32)
    check(mcrmse_loss(yp, yt, max_block_rows=32, num_partials=2),
          mcrmse_loss_ref(yp, yt))

    # Case 4: lane tail (N % 128 != 0) + bf16 inputs; tiny-input plain-XLA path.
    yp = jax.random.normal(ks[6], (37, 7), dtype=jnp.bfloat16)
    yt = jax.random.normal(ks[7], (37, 7), dtype=jnp.bfloat16)
    check(mcrmse_loss(yp, yt), mcrmse_loss_ref(yp, yt))

    print("KERNEL_OK")
</pallas_src>

<mosaic_0001>
module attributes {stable_mosaic.version = 11 : i64} {
  func.func @kernel(%arg0: i32, %arg1: i32, %arg2: memref<32x128xf32, #tpu.memory_space<vmem>>, %arg3: memref<32x128xf32, #tpu.memory_space<vmem>>, %arg4: memref<1x8x128xf32, #tpu.memory_space<vmem>>) attributes {dimension_semantics = [#tpu.dimension_semantics<parallel>, #tpu.dimension_semantics<arbitrary>], iteration_bounds = array<i64: 2, 1>, scalar_prefetch = 0 : i64, scratch_operands = 0 : i64, tpu.core_type = #tpu.core_type<tc>, window_params = [{transform_indices = @transform_0, window_bounds = array<i64: 32, 128>}, {transform_indices = @transform_1, window_bounds = array<i64: 32, 128>}, {transform_indices = @transform_2, window_bounds = array<i64: 1, 8, 128>}]} {
    %c0_i32 = arith.constant 0 : i32
    %0 = arith.cmpi eq, %arg1, %c0_i32 : i32
    %1 = arith.extui %0 : i1 to i32
    %c0_i32_0 = arith.constant 0 : i32
    %2 = arith.cmpi ne, %1, %c0_i32_0 : i32
    scf.if %2 {
      %cst_8 = arith.constant 0.000000e+00 : f32
      %18 = vector.broadcast %cst_8 : f32 to vector<1x8x128xf32>
      %c0_9 = arith.constant 0 : index
      %c0_10 = arith.constant 0 : index
      %c0_11 = arith.constant 0 : index
      %19 = vector.load %arg4[%c0_9, %c0_10, %c0_11] : memref<1x8x128xf32, #tpu.memory_space<vmem>>, vector<1x8x128xf32>
      tpu.vector_store %arg4[%c0_9, %c0_10, %c0_11], %18 {strides = array<i32>} : memref<1x8x128xf32, #tpu.memory_space<vmem>>, vector<1x8x128xf32>,
    } else {
    }
    %c0 = arith.constant 0 : index
    %c0_1 = arith.constant 0 : index
    %3 = vector.load %arg2[%c0, %c0_1] : memref<32x128xf32, #tpu.memory_space<vmem>>, vector<32x128xf32>
    %c0_2 = arith.constant 0 : index
    %c0_3 = arith.constant 0 : index
    %4 = vector.load %arg3[%c0_2, %c0_3] : memref<32x128xf32, #tpu.memory_space<vmem>>, vector<32x128xf32>
    %5 = arith.subf %3, %4 : vector<32x128xf32>
    %6 = arith.mulf %5, %5 : vector<32x128xf32>
    %cst = arith.constant 9.99999971E-10 : f32
    %7 = vector.broadcast %cst : f32 to vector<32x128xf32>
    %8 = arith.addf %6, %7 : vector<32x128xf32>
    %9 = math.sqrt %8 : vector<32x128xf32>
    %c1_i32 = arith.constant 1 : i32
    %10 = arith.muli %arg0, %c1_i32 : i32
    %11 = arith.addi %10, %arg1 : i32
    %c1_i32_4 = arith.constant 1 : i32
    %12 = arith.cmpi slt, %11, %c1_i32_4 : i32
    %13 = arith.extui %12 : i1 to i32
    %c0_i32_5 = arith.constant 0 : i32
    %14 = arith.cmpi ne, %13, %c0_i32_5 : i32
    scf.if %14 {
      %c0_8 = arith.constant 0 : index
      %c0_9 = arith.constant 0 : index
      %c0_10 = arith.constant 0 : index
      %18 = vector.load %arg4[%c0_8, %c0_9, %c0_10] : memref<1x8x128xf32, #tpu.memory_space<vmem>>, vector<1x8x128xf32>
      %19 = vector.shape_cast %9 : vector<32x128xf32> to vector<4x8x128xf32>
      %cst_11 = arith.constant dense<0.000000e+00> : vector<8x128xf32>
      %20 = vector.multi_reduction <add>, %19, %cst_11 [0] : vector<4x8x128xf32> to vector<8x128xf32>
      %21 = vector.shape_cast %20 : vector<8x128xf32> to vector<1x8x128xf32>
      %22 = arith.addf %18, %21 : vector<1x8x128xf32>
      %c0_12 = arith.constant 0 : index
      %c0_13 = arith.constant 0 : index
      %c0_14 = arith.constant 0 : index
      %23 = vector.load %arg4[%c0_12, %c0_13, %c0_14] : memref<1x8x128xf32, #tpu.memory_space<vmem>>, vector<1x8x128xf32>
      tpu.vector_store %arg4[%c0_12, %c0_13, %c0_14], %22 {strides = array<i32>} : memref<1x8x128xf32, #tpu.memory_space<vmem>>, vector<1x8x128xf32>,
    } else {
    }
    %c1_i32_6 = arith.constant 1 : i32
    %15 = arith.cmpi sge, %11, %c1_i32_6 : i32
    %16 = arith.extui %15 : i1 to i32
    %c0_i32_7 = arith.constant 0 : i32
    %17 = arith.cmpi ne, %16, %c0_i32_7 : i32
    scf.if %17 {
      %c32_i32 = arith.constant 32 : i32
      %18 = arith.muli %11, %c32_i32 : i32
      %c48_i32 = arith.constant 48 : i32
      %19 = arith.subi %c48_i32, %18 : i32
      %20 = tpu.iota {dimensions = array<i32: 0>} : vector<32x128xi32>
      %21 = vector.broadcast %19 : i32 to vector<32x128xi32>
      %22 = arith.cmpi slt, %20, %21 : vector<32x128xi32>
      %cst_8 = arith.constant 0.000000e+00 : f32
      %23 = vector.broadcast %cst_8 : f32 to vector<32x128xf32>
      %24 = arith.select %22, %9, %23 : vector<32x128xi1>, vector<32x128xf32>
      %c0_9 = arith.constant 0 : index
      %c0_10 = arith.constant 0 : index
      %c0_11 = arith.constant 0 : index
      %25 = vector.load %arg4[%c0_9, %c0_10, %c0_11] : memref<1x8x128xf32, #tpu.memory_space<vmem>>, vector<1x8x128xf32>
      %26 = vector.shape_cast %24 : vector<32x128xf32> to vector<4x8x128xf32>
      %cst_12 = arith.constant dense<0.000000e+00> : vector<8x128xf32>
      %27 = vector.multi_reduction <add>, %26, %cst_12 [0] : vector<4x8x128xf32> to vector<8x128xf32>
      %28 = vector.shape_cast %27 : vector<8x128xf32> to vector<1x8x128xf32>
      %29 = arith.addf %25, %28 : vector<1x8x128xf32>
      %c0_13 = arith.constant 0 : index
      %c0_14 = arith.constant 0 : index
      %c0_15 = arith.constant 0 : index
      %30 = vector.load %arg4[%c0_13, %c0_14, %c0_15] : memref<1x8x128xf32, #tpu.memory_space<vmem>>, vector<1x8x128xf32>
      tpu.vector_store %arg4[%c0_13, %c0_14, %c0_15], %29 {strides = array<i32>} : memref<1x8x128xf32, #tpu.memory_space<vmem>>, vector<1x8x128xf32>,
    } else {
    }
    return
  }
  func.func @transform_0(%arg0: i32, %arg1: i32) -> (i32, i32) {
    %c1_i32 = arith.constant 1 : i32
    %0 = arith.muli %arg0, %c1_i32 : i32
    %1 = arith.addi %0, %arg1 : i32
    %c0_i32 = arith.constant 0 : i32
    %c0_i32_0 = arith.constant 0 : i32
    return %1, %c0_i32 : i32, i32
  }
  func.func @transform_1(%arg0: i32, %arg1: i32) -> (i32, i32) {
    %c1_i32 = arith.constant 1 : i32
    %0 = arith.muli %arg0, %c1_i32 : i32
    %1 = arith.addi %0, %arg1 : i32
    %c0_i32 = arith.constant 0 : i32
    %c0_i32_0 = arith.constant 0 : i32
    return %1, %c0_i32 : i32, i32
  }
  func.func @transform_2(%arg0: i32, %arg1: i32) -> (i32, i32, i32) {
    %c0_i32 = arith.constant 0 : i32
    %c0_i32_0 = arith.constant 0 : i32
    %c0_i32_1 = arith.constant 0 : i32
    return %arg0, %c0_i32, %c0_i32_0 : i32, i32, i32
  }
}

</mosaic_0001>

<llo_original>
// kernel: tpu_custom_call.1
$region0: #{tpu_custom_call.1}
  #allocation0 [shape = 'u32[]', space=smem, size = 0x4, offset = 0x4, fixed_abs, tag = 'smem constant byte address 0x4 - core index']
  #allocation1 [shape = 'u32[144,128]{1,0:T(1,128)}', space=vmem, size = 0x12000, scoped, tag = 'internal scratch']
  %s0 = inlined_call_operand.hbm [shape: f32[48,128], index: 0, kind: input, shape index: {}]
  %s1 = inlined_call_operand.hbm [shape: f32[48,128], index: 1, kind: input, shape index: {}]
  %s2 = inlined_call_operand.hbm [shape: f32[2,8,128], index: 2, kind: output, shape index: {}]
  %s3 = sld [smem:[#allocation0]]
  $region61: #{tpu_custom_call.1} parent=0
    _
  %s5 = ssub.s32 1, %s3
  %s6 = scalar_select 0, %s5, %s3
  $region1: #{tpu_custom_call.1} parent=0
    #allocation2 [shape = 'u8[32768]{0}', space=vmem, size = 0x8000, scoped, tag = 'input window, operand 0']
    #allocation3 [shape = 's32[2]{0}', space=sflag, size = 0x8, scoped, tag = 'scoped memory for tpu_custom_call.1']
    #allocation4 [shape = 's32[2]{0}', space=sflag, size = 0x8, scoped, tag = 'scoped memory for tpu_custom_call.1']
    #allocation5 [shape = 'u8[32768]{0}', space=vmem, size = 0x8000, scoped, tag = 'input window, operand 1']
    #allocation6 [shape = 's32[2]{0}', space=sflag, size = 0x8, scoped, tag = 'scoped memory for tpu_custom_call.1']
    #allocation7 [shape = 'u8[8192]{0}', space=vmem, size = 0x2000, scoped, tag = 'output window, operand 0']
    %7 = vsyncpa [#allocation3], 0
    %s8 = scalar_lea.sflag [#allocation3], 1
    %9 = vsyncpa %s8, 0
    %10 = vsyncpa [#allocation6], 0
    %s11 = scalar_lea.sflag [#allocation6], 1
    %12 = vsyncpa %s11, 0
    %13 = vsyncpa [#allocation4], 0
    %s14 = scalar_lea.sflag [#allocation4], 1
    %15 = vsyncpa %s14, 0
    loop: start=0, step=1, limit=4
    $region2: #{tpu_custom_call.1} parent=1 // loop_pre_header
      _
    $region3: #{tpu_custom_call.1} parent=1 // loop_header
      %s17 = sphi 0, %s21
      %p18 = scmp.ge.s32.totalorder %s17, 4
      %s24 = sphi 0, %s36
      %s25 = sphi 0, %s32
      %s26 = sphi 0, %s24
      %s27 = sphi 0, %s25
      %s28 = sphi 0, %s26
      %s29 = sphi 0, %s27
      %s41 = sphi 0, %s43
      %s44 = sphi 0, %s41
      %s45 = sphi 0, %s44
      %s61 = sphi 0, %s45
      %s69 = sphi 0, %s71
      %s72 = sphi 0, %s69
      %s73 = sphi 0, %s72
      %s89 = sphi 0, %s73
      %s95 = sphi 0, %s97
      %s98 = sphi 0, %s95
      %s99 = sphi 0, %s98
      %s115 = sphi 0, %s99
    $region4: #{tpu_custom_call.1} parent=1 // loop_header_branch
      %20 = sbr.rel (%p18) target = $region8
    $region5: #{tpu_custom_call.1} parent=1 // loop_body
      %s22 = ssub.s32 %s17, 1
      %s23 = ssub.s32 %s17, 2
      %s30 = sadd.s32 1, %s25
      %p31 = scmp.ge.s32.totalorder %s30, 1
      %s32 = scalar_select %p31, 0, %s30
      %s33 = sadd.s32 1, %s24
      %s34 = scalar_select %p31, %s33, %s24
      %p35 = scmp.ge.s32.totalorder %s34, 2
      %s36 = scalar_select %p35, 0, %s34
      %s37 = sadd.s32 %s24, %s25
      %s38 = sadd.s32 %s36, %s32
      %s39 = ssub.s32 %s37, %s38
      %p40 = scmp.eq.s32.totalorder %s39, 0
      %s42 = sadd.s32 %s41, 1
      %s43 = scalar_select %p40, %s41, %s42
      %p46 = pneg %p40
      %p47 = scmp.eq.s32.totalorder %s17, 1
      %p48 = por %p46, %p47
      %p49 = scmp.ne.s32.totalorder %s41, %s44
      %p50 = scmp.eq.s32.totalorder %s17, 0
      %p51 = por %p49, %p50
      %p52 = scmp.ne.s32.totalorder %s41, %s44
      %p53 = scmp.eq.s32.totalorder %s22, 1
      %p54 = por %p52, %p53
      %p55 = scmp.ne.s32.totalorder %s44, %s45
      %p56 = scmp.eq.s32.totalorder %s22, 0
      %p57 = por %p55, %p56
      %p58 = scmp.ne.s32.totalorder %s44, %s45
      %p59 = scmp.eq.s32.totalorder %s23, 1
      %p60 = por %p58, %p59
      %p62 = scmp.ne.s32.totalorder %s45, %s61
      %p63 = scmp.eq.s32.totalorder %s23, 0
      %p64 = por %p62, %p63
      %s65 = sadd.s32 %s24, %s25
      %s66 = sadd.s32 %s36, %s32
      %s67 = ssub.s32 %s65, %s66
      %p68 = scmp.eq.s32.totalorder %s67, 0
      %s70 = sadd.s32 %s69, 1
      %s71 = scalar_select %p68, %s69, %s70
      %p74 = pneg %p68
      %p75 = scmp.eq.s32.totalorder %s17, 1
      %p76 = por %p74, %p75
      %p77 = scmp.ne.s32.totalorder %s69, %s72
      %p78 = scmp.eq.s32.totalorder %s17, 0
      %p79 = por %p77, %p78
      %p80 = scmp.ne.s32.totalorder %s69, %s72
      %p81 = scmp.eq.s32.totalorder %s22, 1
      %p82 = por %p80, %p81
      %p83 = scmp.ne.s32.totalorder %s72, %s73
      %p84 = scmp.eq.s32.totalorder %s22, 0
      %p85 = por %p83, %p84
      %p86 = scmp.ne.s32.totalorder %s72, %s73
      %p87 = scmp.eq.s32.totalorder %s23, 1
      %p88 = por %p86, %p87
      %p90 = scmp.ne.s32.totalorder %s73, %s89
      %p91 = scmp.eq.s32.totalorder %s23, 0
      %p92 = por %p90, %p91
      %s93 = ssub.s32 %s24, %s36
      %p94 = scmp.eq.s32.totalorder %s93, 0
      %s96 = sadd.s32 %s95, 1
      %s97 = scalar_select %p94, %s95, %s96
      %p100 = pneg %p94
      %p101 = scmp.eq.s32.totalorder %s17, 1
      %p102 = por %p100, %p101
      %p103 = scmp.ne.s32.totalorder %s95, %s98
      %p104 = scmp.eq.s32.totalorder %s17, 0
      %p105 = por %p103, %p104
      %p106 = scmp.ne.s32.totalorder %s95, %s98
      %p107 = scmp.eq.s32.totalorder %s22, 1
      %p108 = por %p106, %p107
      %p109 = scmp.ne.s32.totalorder %s98, %s99
      %p110 = scmp.eq.s32.totalorder %s22, 0
      %p111 = por %p109, %p110
      %p112 = scmp.ne.s32.totalorder %s98, %s99
      %p113 = scmp.eq.s32.totalorder %s23, 1
      %p114 = por %p112, %p113
      %p116 = scmp.ne.s32.totalorder %s99, %s115
      %p117 = scmp.eq.s32.totalorder %s23, 0
      %p118 = por %p116, %p117
      %p119 = scmp.le.s32.totalorder 1, %s17
      %p120 = scmp.lt.s32.totalorder %s17, 3
      %p121 = pnand %p119, %p120
      %p122 = pneg %p121
      // Predicated region
      $region9: #{tpu_custom_call.1} parent=5 // pred_check
        _
      $region10: #{tpu_custom_call.1} parent=5 // pred_check_branch
        %124 = sbr.rel (%p121) target = $region12
      $region11: #{tpu_custom_call.1} parent=5 // pred_region
        %s125 = ssub.s32 %s17, 1
      $region12: #{tpu_custom_call.1} parent=5 // pred_fallthru
        _
      %p126 = scmp.lt.s32.totalorder %s17, 2
      // Predicated region
      $region13: #{tpu_custom_call.1} parent=5 // pred_check
        %p127 = pneg %p126
      $region14: #{tpu_custom_call.1} parent=5 // pred_check_branch
        %129 = sbr.rel (%p127) target = $region16
      $region15: #{tpu_custom_call.1} parent=5 // pred_region
        // Predicated region
        $region17: #{tpu_custom_call.1} parent=15 // pred_check
          %p130 = pneg %p51
        $region18: #{tpu_custom_call.1} parent=15 // pred_check_branch
          %132 = sbr.rel (%p130) target = $region20
        $region19: #{tpu_custom_call.1} parent=15 // pred_region
          %s133 = sand.u32 %s41, 1
          %s134 = scalar_lea.sflag [#allocation3], %s133
          %s135 = sand.u32 %s41, 1
          %s136 = smul.addr %s135, 32
          %s137 = scalar_lea.vmem [#allocation2], %s136
          %s138 = sadd.s32 %s24, %s25
          %s139 = smul.u32 4, %s138
          %s140 = ssub.s32 6, %s139
          %p141 = scmp.lt.s32.totalorder %s140, 4
          %s142 = scalar_select %p141, %s140, 4
          %s143 = smul.u32 128, %s142
          %s145 = ssub.s32 512, %s143
          %146 = vsyncadd %s134, %s145
          %p147 = scmp.ne.s32.totalorder 0, %s143
          %s148 = smul.addr %s139, 128
          %s149 = scalar_lea.hbm %s0, %s148
          %s150 = smul.u32 8, %s142
          %s151 = sshll.u32 %s137, 4
          %s152 = int_to_ptr.vmem [resolvable:$true] %s151
          %s153 = sshll.u32 %s150, 4
          %157 = dma.hbm_to_vmem [thread:$0]  (%p147), %s149, %s153, %s152, %s134, 128, 128, 8
        $region20: #{tpu_custom_call.1} parent=15 // pred_fallthru
          _
        // Predicated region
        $region21: #{tpu_custom_call.1} parent=15 // pred_check
          %p158 = pneg %p79
        $region22: #{tpu_custom_call.1} parent=15 // pred_check_branch
          %160 = sbr.rel (%p158) target = $region24
        $region23: #{tpu_custom_call.1} parent=15 // pred_region
          %s161 = sand.u32 %s69, 1
          %s162 = scalar_lea.sflag [#allocation6], %s161
          %s163 = sand.u32 %s69, 1
          %s164 = smul.addr %s163, 32
          %s165 = scalar_lea.vmem [#allocation5], %s164
          %s166 = sadd.s32 %s24, %s25
          %s167 = smul.u32 4, %s166
          %s168 = ssub.s32 6, %s167
          %p169 = scmp.lt.s32.totalorder %s168, 4
          %s170 = scalar_select %p169, %s168, 4
          %s171 = smul.u32 128, %s170
          %s173 = ssub.s32 512, %s171
          %174 = vsyncadd %s162, %s173
          %p175 = scmp.ne.s32.totalorder 0, %s171
          %s176 = smul.addr %s167, 128
          %s177 = scalar_lea.hbm %s1, %s176
          %s178 = smul.u32 8, %s170
          %s179 = sshll.u32 %s165, 4
          %s180 = int_to_ptr.vmem [resolvable:$true] %s179
          %s181 = sshll.u32 %s178, 4
          %185 = dma.hbm_to_vmem [thread:$0]  (%p175), %s177, %s181, %s180, %s162, 128, 128, 8
        $region24: #{tpu_custom_call.1} parent=15 // pred_fallthru
          _
      $region16: #{tpu_custom_call.1} parent=5 // pred_fallthru
        _
      %p186 = scmp.le.s32.totalorder 1, %s17
      %p187 = scmp.lt.s32.totalorder %s17, 3
      %p188 = pnand %p186, %p187
      %p189 = pneg %p188
      // Predicated region
      $region25: #{tpu_custom_call.1} parent=5 // pred_check
        _
      $region26: #{tpu_custom_call.1} parent=5 // pred_check_branch
        %191 = sbr.rel (%p188) target = $region28
      $region27: #{tpu_custom_call.1} parent=5 // pred_region
        %s192 = ssub.s32 %s17, 1
        %s193 = sand.u32 %s44, 1
        %s194 = scalar_lea.sflag [#allocation3], %s193
        %s195 = sand.u32 %s44, 1
        %s196 = smul.addr %s195, 32
        %s197 = scalar_lea.vmem [#allocation2], %s196
        // Predicated region
        $region29: #{tpu_custom_call.1} parent=27 // pred_check
          %p198 = pneg %p57
        $region30: #{tpu_custom_call.1} parent=27 // pred_check_branch
          %200 = sbr.rel (%p198) target = $region32
        $region31: #{tpu_custom_call.1} parent=27 // pred_region
          %201 = dma.done %s194, 512
        $region32: #{tpu_custom_call.1} parent=27 // pred_fallthru
          _
        %s202 = sand.u32 %s72, 1
        %s203 = scalar_lea.sflag [#allocation6], %s202
        %s204 = sand.u32 %s72, 1
        %s205 = smul.addr %s204, 32
        %s206 = scalar_lea.vmem [#allocation5], %s205
        // Predicated region
        $region33: #{tpu_custom_call.1} parent=27 // pred_check
          %p207 = pneg %p85
        $region34: #{tpu_custom_call.1} parent=27 // pred_check_branch
          %209 = sbr.rel (%p207) target = $region36
        $region35: #{tpu_custom_call.1} parent=27 // pred_region
          %210 = dma.done %s203, 512
        $region36: #{tpu_custom_call.1} parent=27 // pred_fallthru
          _
        %s211 = sand.u32 %s44, 1
        %s212 = scalar_lea.sflag [#allocation3], %s211
        %s213 = sand.u32 %s44, 1
        %s214 = smul.addr %s213, 32
        %s215 = scalar_lea.vmem [#allocation2], %s214
        %p216 = pneg %p57
        %p217 = pneg %p54
        %s218 = sand.u32 %s72, 1
        %s219 = scalar_lea.sflag [#allocation6], %s218
        %s220 = sand.u32 %s72, 1
        %s221 = smul.addr %s220, 32
        %s222 = scalar_lea.vmem [#allocation5], %s221
        %p223 = pneg %p85
        %p224 = pneg %p82
        %p225 = pneg %p111
        %p226 = pneg %p108
        %s227 = sand.u32 %s98, 1
        %s228 = scalar_lea.sflag [#allocation4], %s227
        %s229 = sand.u32 %s98, 1
        %s230 = smul.addr %s229, 8
        %s231 = scalar_lea.vmem [#allocation7], %s230
        %s232 = sadd.s32 %s26, %s27
        %s233 = smul.u32 4, %s232
        %s234 = ssub.s32 6, %s233
        %p235 = scmp.lt.s32.totalorder %s234, 4
        %s236 = scalar_select %p235, %s234, 4
        %s237 = smul.u32 128, %s236
        %s238 = sadd.s32 %s26, %s27
        %s239 = smul.u32 4, %s238
        %s240 = ssub.s32 6, %s239
        %p241 = scmp.lt.s32.totalorder %s240, 4
        %s242 = scalar_select %p241, %s240, 4
        %s243 = smul.u32 128, %s242
        %p244 = scmp.eq.s32.totalorder %s27, 0
        // Predicated region
        $region37: #{tpu_custom_call.1} parent=27 // pred_check
          %p245 = pneg %p244
        $region38: #{tpu_custom_call.1} parent=27 // pred_check_branch
          %247 = sbr.rel (%p245) target = $region40
        $region39: #{tpu_custom_call.1} parent=27 // pred_region
          %248 = vst [vmem:[%s231] sm:$0xff] 0.0
        $region40: #{tpu_custom_call.1} parent=27 // pred_fallthru
          _
        %v249 = vld [vmem:[%s197] sm:$0xff]
        %v250 = vld [vmem:[%s197 + $0x8] sm:$0xff]
        %v251 = vld [vmem:[%s197 + $0x10] sm:$0xff]
        %v252 = vld [vmem:[%s197 + $0x18] sm:$0xff]
        %v253 = vld [vmem:[%s206] sm:$0xff]
        %v254 = vld [vmem:[%s206 + $0x8] sm:$0xff]
        %v255 = vld [vmem:[%s206 + $0x10] sm:$0xff]
        %v256 = vld [vmem:[%s206 + $0x18] sm:$0xff]
        %v257 = vsub.f32 %v249, %v253
        %v258 = vsub.f32 %v250, %v254
        %v259 = vsub.f32 %v251, %v255
        %v260 = vsub.f32 %v252, %v256
        %v261 = vmul.f32 %v257, %v257
        %v262 = vmul.f32 %v258, %v258
        %v263 = vmul.f32 %v259, %v259
        %v264 = vmul.f32 %v260, %v260
        %v265 = vadd.f32 %v261, 1e-09
        %v266 = vadd.f32 %v262, 1e-09
        %v267 = vadd.f32 %v263, 1e-09
        %v268 = vadd.f32 %v264, 1e-09
        %v269 = vrsqrt.pop %v265
        %v270 = vmul.f32 %v265, %v269
        %vm271 = vcmp.eq.f32.partialorder %v265, inf
        %v272 = vsel %vm271, %v265, %v270
        %vm273 = vcmp.eq.f32.partialorder %v265, 0.0
        %v274 = vand.u32 %v265, 2147483648
        %v275 = vsel %vm273, %v274, %v272
        %v276 = vrsqrt.pop %v266
        %v277 = vmul.f32 %v266, %v276
        %vm278 = vcmp.eq.f32.partialorder %v266, inf
        %v279 = vsel %vm278, %v266, %v277
        %vm280 = vcmp.eq.f32.partialorder %v266, 0.0
        %v281 = vand.u32 %v266, 2147483648
        %v282 = vsel %vm280, %v281, %v279
        %v283 = vrsqrt.pop %v267
        %v284 = vmul.f32 %v267, %v283
        %vm285 = vcmp.eq.f32.partialorder %v267, inf
        %v286 = vsel %vm285, %v267, %v284
        %vm287 = vcmp.eq.f32.partialorder %v267, 0.0
        %v288 = vand.u32 %v267, 2147483648
        %v289 = vsel %vm287, %v288, %v286
        %v290 = vrsqrt.pop %v268
        %v291 = vmul.f32 %v268, %v290
        %vm292 = vcmp.eq.f32.partialorder %v268, inf
        %v293 = vsel %vm292, %v268, %v291
        %vm294 = vcmp.eq.f32.partialorder %v268, 0.0
        %v295 = vand.u32 %v268, 2147483648
        %v296 = vsel %vm294, %v295, %v293
        %s297 = sadd.s32 %s26, %s27
        %p298 = scmp.lt.s32.totalorder %s297, 1
        // Predicated region
        $region41: #{tpu_custom_call.1} parent=27 // pred_check
          %p299 = pneg %p298
        $region42: #{tpu_custom_call.1} parent=27 // pred_check_branch
          %301 = sbr.rel (%p299) target = $region44
        $region43: #{tpu_custom_call.1} parent=27 // pred_region
          %v302 = vld [vmem:[%s231] sm:$0xff]
          %v303 = vadd.f32 %v275, %v282
          %v304 = vadd.f32 %v303, %v289
          %v305 = vadd.f32 %v304, %v296
          %v306 = vadd.f32 %v302, %v305
          %307 = vst [vmem:[%s231] sm:$0xff] %v306
        $region44: #{tpu_custom_call.1} parent=27 // pred_fallthru
          _
        %p308 = scmp.ge.s32.totalorder %s297, 1
        // Predicated region
        $region45: #{tpu_custom_call.1} parent=27 // pred_check
          %p309 = pneg %p308
        $region46: #{tpu_custom_call.1} parent=27 // pred_check_branch
          %311 = sbr.rel (%p309) target = $region48
        $region47: #{tpu_custom_call.1} parent=27 // pred_region
          %s312 = smul.u32 %s297, 32
          %s313 = ssub.s32 48, %s312
          %v314 = vlaneseq
          %v315 = vshrl.u32 %v314, 7
          %v316 = vadd.s32 %v315, 8
          %v317 = vadd.s32 %v315, 16
          %v318 = vadd.s32 %v315, 24
          %v319 = vstv %s313
          %vm320 = vcmp.lt.s32.totalorder %v315, %v319
          %vm321 = vcmp.lt.s32.totalorder %v316, %v319
          %vm322 = vcmp.lt.s32.totalorder %v317, %v319
          %vm323 = vcmp.lt.s32.totalorder %v318, %v319
          %v324 = vsel %vm320, %v275, 0.0
          %v325 = vsel %vm321, %v282, 0.0
          %v326 = vsel %vm322, %v289, 0.0
          %v327 = vsel %vm323, %v296, 0.0
          %v328 = vld [vmem:[%s231] sm:$0xff]
          %v329 = vadd.f32 %v324, %v325
          %v330 = vadd.f32 %v329, %v326
          %v331 = vadd.f32 %v330, %v327
          %v332 = vadd.f32 %v328, %v331
          %333 = vst [vmem:[%s231] sm:$0xff] %v332
        $region48: #{tpu_custom_call.1} parent=27 // pred_fallthru
          _
        %s334 = sand.u32 %s98, 1
        %s335 = scalar_lea.sflag [#allocation4], %s334
        %s336 = sand.u32 %s98, 1
        %s337 = smul.addr %s336, 8
        %s338 = scalar_lea.vmem [#allocation7], %s337
        // Predicated region
        $region49: #{tpu_custom_call.1} parent=27 // pred_check
          %p339 = pneg %p108
        $region50: #{tpu_custom_call.1} parent=27 // pred_check_branch
          %341 = sbr.rel (%p339) target = $region52
        $region51: #{tpu_custom_call.1} parent=27 // pred_region
          %s343 = ssub.s32 128, 128
          %344 = vsyncadd %s335, %s343
          %s345 = smul.addr %s26, 128
          %s346 = scalar_lea.hbm %s2, %s345
          %s348 = sshll.u32 %s338, 4
          %s349 = int_to_ptr.vmem [resolvable:$true] %s348
          %351 = dma.vmem_to_hbm [thread:$0]  %s349, 128, %s346, %s335
        $region52: #{tpu_custom_call.1} parent=27 // pred_fallthru
          _
      $region28: #{tpu_custom_call.1} parent=5 // pred_fallthru
        _
      %p352 = scmp.le.s32.totalorder 2, %s17
      // Predicated region
      $region53: #{tpu_custom_call.1} parent=5 // pred_check
        %p353 = pneg %p352
      $region54: #{tpu_custom_call.1} parent=5 // pred_check_branch
        %355 = sbr.rel (%p353) target = $region56
      $region55: #{tpu_custom_call.1} parent=5 // pred_region
        %s356 = ssub.s32 %s17, 2
        // Predicated region
        $region57: #{tpu_custom_call.1} parent=55 // pred_check
          %p357 = pneg %p114
        $region58: #{tpu_custom_call.1} parent=55 // pred_check_branch
          %359 = sbr.rel (%p357) target = $region60
        $region59: #{tpu_custom_call.1} parent=55 // pred_region
          %s360 = sand.u32 %s99, 1
          %s361 = scalar_lea.sflag [#allocation4], %s360
          %s362 = sand.u32 %s99, 1
          %s363 = smul.addr %s362, 8
          %s364 = scalar_lea.vmem [#allocation7], %s363
          %365 = dma.done %s361, 128
        $region60: #{tpu_custom_call.1} parent=55 // pred_fallthru
          _
      $region56: #{tpu_custom_call.1} parent=5 // pred_fallthru
        _
    $region6: #{tpu_custom_call.1} parent=1 // loop_footer
      %s21 = sadd.s32 1, %s17
    $region7: #{tpu_custom_call.1} parent=1 // loop_footer_branch
      %16 = sbr.rel target = $region3
    $region8: #{tpu_custom_call.1} parent=1 // loop_exit
      _
    %366 = vsyncpa [#allocation3], 1
    %s367 = scalar_lea.sflag [#allocation3], 1
    %368 = vsyncpa %s367, 1
    %369 = vsyncpa [#allocation6], 1
    %s370 = scalar_lea.sflag [#allocation6], 1
    %371 = vsyncpa %s370, 1
    %372 = vsyncpa [#allocation4], 1
    %s373 = scalar_lea.sflag [#allocation4], 1
    %374 = vsyncpa %s373, 1

</llo_original>
